<compile_context>
chip_gen: v6e
topology: v6e:2x2x1
jax: 0.10.0
libtpu: 0.0.40
codegen_flags: <defaults>
</compile_context>

<pallas_src>
import functools

import jax
import jax.numpy as jnp
from jax.experimental import pallas as pl
from jax.experimental.pallas import tpu as pltpu

_MIB = 1024 * 1024


def _label_smoothing_kernel(pred_ref, tgt_ref, out_ref, *, smoothing, classes,
                            use_ignore, n_rows, tile_n, bf16_math):
    # pred_ref: (TILE_N, C) VMEM (input dtype), tgt_ref: (TILE_N, 1) i32 VMEM
    # out_ref : (TILE_N, 1) f32 VMEM (per-row loss)
    i = pl.program_id(0)
    x = pred_ref[...]
    if not bf16_math:
        x = x.astype(jnp.float32)       # f32 math path (f32 inputs / v5e)
    tn, c = x.shape

    confidence = 1.0 - smoothing
    off_value = smoothing / (classes - 1)

    # --- log-sum-exp along the class (lane) axis -------------------------
    # The subtraction and exp stay in the input dtype (bf16 EUP on v6e/v7x);
    # all reductions accumulate in f32.
    m = jnp.max(x, axis=-1, keepdims=True)                       # (TILE_N, 1)
    e = jnp.exp(x - m)                                           # (TILE_N, C)
    lse = m.astype(jnp.float32) + jnp.log(
        jnp.sum(e, axis=-1, keepdims=True, dtype=jnp.float32))   # (TILE_N, 1)

    # --- target handling (scatter expressed as a masked lane reduction) --
    tgt = tgt_ref[...]                                           # (TILE_N, 1) i32
    if use_ignore:
        # NOTE: the PyTorch module hardcodes the ignored label as -1
        # (`mask = target == -1`) regardless of the ignore_index value passed
        # to __init__; we match that behavior exactly.
        ignore_mask = tgt == -1                                  # (TILE_N, 1)
        tgt_eff = jnp.where(ignore_mask, 0, tgt)
    else:
        tgt_eff = tgt

    # (1, C) iota broadcast against the (TILE_N, 1) target: the one-hot mask
    # lives in vregs without a full (TILE_N, C) i32 VMEM temporary.
    col_ids = jax.lax.broadcasted_iota(jnp.int32, (1, c), 1)     # (1, C)
    onehot = col_ids == tgt_eff                                  # (TILE_N, C) bool

    sum_x = jnp.sum(x, axis=-1, keepdims=True, dtype=jnp.float32)
    tgt_x = jnp.sum(jnp.where(onehot, x, 0.0), axis=-1, keepdims=True,
                    dtype=jnp.float32)

    # sum(logp) = sum_x - C*lse ; logp[target] = tgt_x - lse  (no (N,C) logp
    # or onehot*logp temporaries are materialized).
    sum_logp = sum_x - classes * lse
    tgt_logp = tgt_x - lse
    row_loss = -(off_value * (sum_logp - tgt_logp) + confidence * tgt_logp)

    if use_ignore:
        row_loss = jnp.where(ignore_mask, 0.0, row_loss)

    # Mask rows past the true N in a (possibly partial) last tile.
    row_ids = i * tile_n + jax.lax.broadcasted_iota(jnp.int32, (tn, 1), 0)
    row_loss = jnp.where(row_ids < n_rows, row_loss, 0.0)

    out_ref[...] = row_loss


def _vmem_capacity_bytes():
    """Physical VMEM per TensorCore (generation-aware); conservative fallback."""
    try:
        return int(pltpu.get_tpu_info().vmem_capacity_bytes)
    except Exception:
        return 64 * _MIB   # v7x-sized fallback (the smallest current VMEM)


def _per_row_vmem_bytes(c, pred_itemsize, bf16_math):
    """Conservative VMEM bytes needed per row of a tile."""
    pred_db = 2 * c * pred_itemsize                 # double-buffered pred tile
    tmp_item = 2 if bf16_math else 4                # (x-m), exp, masked-x live temps
    temps = 3 * c * tmp_item + c * 4                # + one f32-width intermediate
    # target (i32) + out (f32) blocks are lane-padded to 128 and double-buffered.
    narrow = 2 * (128 * 4 + 128 * 4)
    return pred_db + temps + narrow


def _pick_tile_n(n, c, pred_itemsize, bf16_math, vmem_capacity,
                 pred_bytes_per_step=3 * _MIB):
    """Row tile: ~3 MiB of pred per step, bounded by the VMEM working set,
    and at least 2 tiles (megacore) whenever N allows it."""
    if n <= 8:
        return n
    per_row = _per_row_vmem_bytes(c, pred_itemsize, bf16_math)
    vmem_budget = min(int(0.5 * vmem_capacity), 40 * _MIB)
    by_vmem = max(8, vmem_budget // per_row)
    by_dma = max(8, pred_bytes_per_step // max(1, c * pred_itemsize))
    t = min(n, by_vmem, by_dma)
    if n >= 16:                                     # keep >= 2 tiles for v7x's 2 TCs
        t = min(t, (n + 1) // 2)
    t = max(8, (t // 8) * 8)                        # (8,128) rule
    if t >= n:
        return n
    return int(t)


def label_smoothing_loss(pred, target, *, classes, smoothing=0.1,
                         ignore_index=None, reduction='mean', tile_n=None):
    """Pallas implementation of LabelSmoothingLoss.forward.

    pred:   (N, C) float logits (f32 or bf16 — passed through unconverted)
    target: (N,)   int class indices (-1 == ignored if ignore_index is set,
            exactly as in the PyTorch module which hardcodes -1)
    """
    n, c = pred.shape
    assert c == classes
    tgt2d = target.reshape(n, 1).astype(jnp.int32)

    itemsize = jnp.dtype(pred.dtype).itemsize
    bf16_math = pred.dtype == jnp.bfloat16
    vmem_cap = _vmem_capacity_bytes()

    if tile_n is None:
        tile_n = _pick_tile_n(n, c, itemsize, bf16_math, vmem_cap)
    else:
        # Round user-supplied tiles so the BlockSpec always satisfies the
        # (8,128) rule: multiple of 8 unless it covers the full row extent.
        tile_n = int(max(1, tile_n))
        if tile_n < n:
            tile_n = max(8, (tile_n // 8) * 8)
        if tile_n >= n:
            tile_n = n
    num_tiles = pl.cdiv(n, tile_n)

    # Scoped VMEM limit from the real working set + headroom, capped per
    # generation (60% of physical VMEM: ~38 MiB on v7x, ~77 MiB on v5e/v6e).
    working_set = _per_row_vmem_bytes(c, itemsize, bf16_math) * tile_n
    vmem_limit = int(min(max(working_set + 8 * _MIB, 16 * _MIB),
                         int(0.60 * vmem_cap)))

    kernel = functools.partial(
        _label_smoothing_kernel,
        smoothing=float(smoothing),
        classes=int(classes),
        use_ignore=(ignore_index is not None),
        n_rows=int(n),
        tile_n=tile_n,
        bf16_math=bf16_math,
    )

    cost = pl.CostEstimate(
        flops=6 * n * c,
        transcendentals=n * c + n,
        bytes_accessed=n * c * itemsize + n * 4 + n * 4,
    )

    grid_spec = pltpu.PrefetchScalarGridSpec(
        num_scalar_prefetch=0,
        grid=(num_tiles,),
        in_specs=[
            pl.BlockSpec((tile_n, c), lambda i: (i, 0)),   # pred row tile
            pl.BlockSpec((tile_n, 1), lambda i: (i, 0)),   # target row tile
        ],
        out_specs=pl.BlockSpec((tile_n, 1), lambda i: (i, 0)),
    )

    per_row = pl.pallas_call(
        kernel,
        out_shape=jax.ShapeDtypeStruct((n, 1), jnp.float32),
        grid_spec=grid_spec,
        compiler_params=pltpu.CompilerParams(
            dimension_semantics=("parallel",),
            vmem_limit_bytes=vmem_limit,
        ),
        cost_estimate=cost,
    )(pred, tgt2d)

    per_row = per_row[:, 0]
    if reduction == 'mean':
        # Matches torch.mean: divide by the full row count N (ignored rows
        # contribute zero loss but still count in the denominator).
        return jnp.sum(per_row) / n
    return per_row


def _reference(pred, target, *, classes, smoothing=0.1, ignore_index=None,
               reduction='mean'):
    # Pure-JAX reference mirroring the PyTorch module.
    logp = jax.nn.log_softmax(pred.astype(jnp.float32), axis=-1)
    off = smoothing / (classes - 1)
    true_dist = jnp.full_like(logp, off)
    if ignore_index is not None:
        mask = target == -1
        filt = jnp.where(mask, 0, target)
        true_dist = true_dist.at[jnp.arange(pred.shape[0]), filt].set(1.0 - smoothing)
        true_dist = jnp.where(mask[:, None], 0.0, true_dist)
    else:
        true_dist = true_dist.at[jnp.arange(pred.shape[0]), target].set(1.0 - smoothing)
    per_row = jnp.sum(-true_dist * logp, axis=-1)
    return jnp.mean(per_row) if reduction == 'mean' else per_row


if __name__ == "__main__":
    key = jax.random.PRNGKey(0)
    N, C = 20, 128                 # small: 128 classes (lane-aligned), 20 rows
    k1, k2 = jax.random.split(key)
    pred = jax.random.normal(k1, (N, C), dtype=jnp.float32)
    target = jax.random.randint(k2, (N,), 0, C, dtype=jnp.int32)

    # 1) Default config (smoothing=0.1, reduction='mean').  tile_n=8 forces a
    #    3-step row grid with a partial last tile (exercises padding mask).
    loss = label_smoothing_loss(pred, target, classes=C, smoothing=0.1, tile_n=8)
    loss = jax.block_until_ready(loss)
    ref = _reference(pred, target, classes=C, smoothing=0.1)
    assert jnp.allclose(loss, ref, atol=1e-5, rtol=1e-5), (loss, ref)

    # 2) ignore_index branch (target == -1 rows contribute zero), 'none' reduce.
    target_ig = target.at[0].set(-1)
    loss_vec = label_smoothing_loss(pred, target_ig, classes=C, smoothing=0.1,
                                    ignore_index=-1, reduction='none', tile_n=8)
    loss_vec = jax.block_until_ready(loss_vec)
    ref_vec = _reference(pred, target_ig, classes=C, smoothing=0.1,
                         ignore_index=-1, reduction='none')
    assert jnp.allclose(loss_vec, ref_vec, atol=1e-5, rtol=1e-5), (loss_vec, ref_vec)

    # 3) bf16 logits: pass-through DMA + bf16 exp path, auto tile (>= 2 tiles).
    pred_bf16 = pred.astype(jnp.bfloat16)
    loss_bf = label_smoothing_loss(pred_bf16, target, classes=C, smoothing=0.1)
    loss_bf = jax.block_until_ready(loss_bf)
    ref_bf = _reference(pred_bf16, target, classes=C, smoothing=0.1)
    assert jnp.allclose(loss_bf, ref_bf, atol=5e-2, rtol=5e-2), (loss_bf, ref_bf)

    # 4) Class count NOT a multiple of 128 (padded lanes) + partial last row
    #    tile + a user tile_n (10) that must be rounded to a multiple of 8.
    C2 = 200
    k3, k4 = jax.random.split(k2)
    pred2 = jax.random.normal(k3, (N, C2), dtype=jnp.float32)
    target2 = jax.random.randint(k4, (N,), 0, C2, dtype=jnp.int32)
    loss2 = label_smoothing_loss(pred2, target2, classes=C2, smoothing=0.1,
                                 reduction='none', tile_n=10)
    loss2 = jax.block_until_ready(loss2)
    ref2 = _reference(pred2, target2, classes=C2, smoothing=0.1, reduction='none')
    assert jnp.allclose(loss2, ref2, atol=1e-5, rtol=1e-5), (loss2, ref2)

    print("KERNEL_OK")
</pallas_src>

<mosaic_0001>
module attributes {stable_mosaic.version = 11 : i64} {
  func.func @_label_smoothing_kernel(%arg0: i32, %arg1: memref<8x128xf32, #tpu.memory_space<vmem>>, %arg2: memref<8x1xi32, #tpu.memory_space<vmem>>, %arg3: memref<8x1xf32, #tpu.memory_space<vmem>>) attributes {dimension_semantics = [#tpu.dimension_semantics<parallel>], iteration_bounds = array<i64: 3>, scalar_prefetch = 0 : i64, scratch_operands = 0 : i64, tpu.core_type = #tpu.core_type<tc>, window_params = [{transform_indices = @transform_0, window_bounds = array<i64: 8, 128>}, {transform_indices = @transform_1, window_bounds = array<i64: 8, 1>}, {transform_indices = @transform_2, window_bounds = array<i64: 8, 1>}]} {
    %c0 = arith.constant 0 : index
    %c0_0 = arith.constant 0 : index
    %0 = vector.load %arg1[%c0, %c0_0] : memref<8x128xf32, #tpu.memory_space<vmem>>, vector<8x128xf32>
    %cst = arith.constant dense<0xFF800000> : vector<8xf32>
    %1 = vector.multi_reduction <maximumf>, %0, %cst [1] : vector<8x128xf32> to vector<8xf32>
    %2 = vector.shape_cast %1 : vector<8xf32> to vector<8x1xf32>
    %3 = vector.broadcast %2 : vector<8x1xf32> to vector<8x128xf32>
    %4 = arith.subf %0, %3 : vector<8x128xf32>
    %5 = math.exp %4 : vector<8x128xf32>
    %cst_1 = arith.constant dense<0.000000e+00> : vector<8xf32>
    %6 = vector.multi_reduction <add>, %5, %cst_1 [1] : vector<8x128xf32> to vector<8xf32>
    %7 = vector.shape_cast %6 : vector<8xf32> to vector<8x1xf32>
    %8 = math.log %7 : vector<8x1xf32>
    %9 = arith.addf %2, %8 : vector<8x1xf32>
    %c0_2 = arith.constant 0 : index
    %c0_3 = arith.constant 0 : index
    %10 = vector.load %arg2[%c0_2, %c0_3] : memref<8x1xi32, #tpu.memory_space<vmem>>, vector<8x1xi32>
    %11 = tpu.iota {dimensions = array<i32: 1>} : vector<1x128xi32>
    %12 = vector.broadcast %11 : vector<1x128xi32> to vector<8x128xi32>
    %13 = vector.broadcast %10 : vector<8x1xi32> to vector<8x128xi32>
    %14 = arith.cmpi eq, %12, %13 : vector<8x128xi32>
    %cst_4 = arith.constant dense<0.000000e+00> : vector<8xf32>
    %15 = vector.multi_reduction <add>, %0, %cst_4 [1] : vector<8x128xf32> to vector<8xf32>
    %16 = vector.shape_cast %15 : vector<8xf32> to vector<8x1xf32>
    %cst_5 = arith.constant 0.000000e+00 : f32
    %17 = vector.broadcast %cst_5 : f32 to vector<8x128xf32>
    %18 = arith.select %14, %0, %17 : vector<8x128xi1>, vector<8x128xf32>
    %cst_6 = arith.constant dense<0.000000e+00> : vector<8xf32>
    %19 = vector.multi_reduction <add>, %18, %cst_6 [1] : vector<8x128xf32> to vector<8xf32>
    %20 = vector.shape_cast %19 : vector<8xf32> to vector<8x1xf32>
    %cst_7 = arith.constant 1.280000e+02 : f32
    %21 = vector.broadcast %cst_7 : f32 to vector<8x1xf32>
    %22 = arith.mulf %21, %9 : vector<8x1xf32>
    %23 = arith.subf %16, %22 : vector<8x1xf32>
    %24 = arith.subf %20, %9 : vector<8x1xf32>
    %25 = arith.subf %23, %24 : vector<8x1xf32>
    %cst_8 = arith.constant 7.87401571E-4 : f32
    %26 = vector.broadcast %cst_8 : f32 to vector<8x1xf32>
    %27 = arith.mulf %26, %25 : vector<8x1xf32>
    %cst_9 = arith.constant 0.899999976 : f32
    %28 = vector.broadcast %cst_9 : f32 to vector<8x1xf32>
    %29 = arith.mulf %28, %24 : vector<8x1xf32>
    %30 = arith.addf %27, %29 : vector<8x1xf32>
    %cst_10 = arith.constant 0.000000e+00 : f32
    %31 = vector.broadcast %cst_10 : f32 to vector<8x1xf32>
    %32 = arith.subf %31, %30 : vector<8x1xf32>
    %c8_i32 = arith.constant 8 : i32
    %33 = arith.muli %arg0, %c8_i32 : i32
    %34 = tpu.iota {dimensions = array<i32: 0>} : vector<8x1xi32>
    %35 = vector.broadcast %33 : i32 to vector<8x1xi32>
    %36 = arith.addi %35, %34 : vector<8x1xi32>
    %c20_i32 = arith.constant 20 : i32
    %37 = vector.broadcast %c20_i32 : i32 to vector<8x1xi32>
    %38 = arith.cmpi slt, %36, %37 : vector<8x1xi32>
    %cst_11 = arith.constant 0.000000e+00 : f32
    %39 = vector.broadcast %cst_11 : f32 to vector<8x1xf32>
    %40 = arith.select %38, %32, %39 : vector<8x1xi1>, vector<8x1xf32>
    %c0_12 = arith.constant 0 : index
    %c0_13 = arith.constant 0 : index
    %41 = vector.load %arg3[%c0_12, %c0_13] : memref<8x1xf32, #tpu.memory_space<vmem>>, vector<8x1xf32>
    tpu.vector_store %arg3[%c0_12, %c0_13], %40 {strides = array<i32>} : memref<8x1xf32, #tpu.memory_space<vmem>>, vector<8x1xf32>,
    return
  }
  func.func @transform_0(%arg0: i32) -> (i32, i32) {
    %c0_i32 = arith.constant 0 : i32
    %c0_i32_0 = arith.constant 0 : i32
    return %arg0, %c0_i32 : i32, i32
  }
  func.func @transform_1(%arg0: i32) -> (i32, i32) {
    %c0_i32 = arith.constant 0 : i32
    %c0_i32_0 = arith.constant 0 : i32
    return %arg0, %c0_i32 : i32, i32
  }
  func.func @transform_2(%arg0: i32) -> (i32, i32) {
    %c0_i32 = arith.constant 0 : i32
    %c0_i32_0 = arith.constant 0 : i32
    return %arg0, %c0_i32 : i32, i32
  }
}

</mosaic_0001>

<llo_original>
// kernel: tpu_custom_call.1
$region0: #{tpu_custom_call.1}
  #allocation0 [shape = 'u32[]', space=smem, size = 0x4, offset = 0x4, fixed_abs, tag = 'smem constant byte address 0x4 - core index']
  #allocation1 [shape = 'u32[144,128]{1,0:T(1,128)}', space=vmem, size = 0x12000, scoped, tag = 'internal scratch']
  %s0 = inlined_call_operand.vmem [shape: f32[20,128], index: 0, kind: input, shape index: {}]
  %s1 = inlined_call_operand.vmem [shape: s32[20,1], index: 1, kind: input, shape index: {}]
  %s2 = inlined_call_operand.vmem [shape: f32[20,1], index: 2, kind: output, shape index: {}]
  %s3 = sld [smem:[#allocation0]]
  $region41: #{tpu_custom_call.1} parent=0
    _
  %s5 = ssub.s32 1, %s3
  %s6 = scalar_select 0, %s5, %s3
  loop: start=0, step=1, limit=5
  $region2: #{tpu_custom_call.1} parent=0 // loop_pre_header
    _
  $region3: #{tpu_custom_call.1} parent=0 // loop_header
    %s8 = sphi 0, %s12
    %p9 = scmp.ge.s32.totalorder %s8, 5
    %s18 = sphi 0, %s20
    %s21 = sphi 0, %s18
    %s22 = sphi 0, %s21
    %s38 = sphi 0, %s22
    %s44 = sphi 0, %s46
    %s47 = sphi 0, %s44
    %s48 = sphi 0, %s47
    %s64 = sphi 0, %s48
    %s70 = sphi 0, %s72
    %s73 = sphi 0, %s70
    %s74 = sphi 0, %s73
    %s90 = sphi 0, %s74
  $region4: #{tpu_custom_call.1} parent=0 // loop_header_branch
    %11 = sbr.rel (%p9) target = $region8
  $region5: #{tpu_custom_call.1} parent=0 // loop_body
    %s13 = ssub.s32 %s8, 1
    %s14 = ssub.s32 %s8, 2
    %s15 = sadd.s32 %s8, 1
    %s16 = ssub.s32 %s8, %s15
    %p17 = scmp.eq.s32.totalorder %s16, 0
    %s19 = sadd.s32 %s18, 1
    %s20 = scalar_select %p17, %s18, %s19
    %p23 = pneg %p17
    %p24 = scmp.eq.s32.totalorder %s8, 2
    %p25 = por %p23, %p24
    %p26 = scmp.ne.s32.totalorder %s18, %s21
    %p27 = scmp.eq.s32.totalorder %s8, 0
    %p28 = por %p26, %p27
    %p29 = scmp.ne.s32.totalorder %s18, %s21
    %p30 = scmp.eq.s32.totalorder %s13, 2
    %p31 = por %p29, %p30
    %p32 = scmp.ne.s32.totalorder %s21, %s22
    %p33 = scmp.eq.s32.totalorder %s13, 0
    %p34 = por %p32, %p33
    %p35 = scmp.ne.s32.totalorder %s21, %s22
    %p36 = scmp.eq.s32.totalorder %s14, 2
    %p37 = por %p35, %p36
    %p39 = scmp.ne.s32.totalorder %s22, %s38
    %p40 = scmp.eq.s32.totalorder %s14, 0
    %p41 = por %p39, %p40
    %s42 = ssub.s32 %s8, %s15
    %p43 = scmp.eq.s32.totalorder %s42, 0
    %s45 = sadd.s32 %s44, 1
    %s46 = scalar_select %p43, %s44, %s45
    %p49 = pneg %p43
    %p50 = scmp.eq.s32.totalorder %s8, 2
    %p51 = por %p49, %p50
    %p52 = scmp.ne.s32.totalorder %s44, %s47
    %p53 = scmp.eq.s32.totalorder %s8, 0
    %p54 = por %p52, %p53
    %p55 = scmp.ne.s32.totalorder %s44, %s47
    %p56 = scmp.eq.s32.totalorder %s13, 2
    %p57 = por %p55, %p56
    %p58 = scmp.ne.s32.totalorder %s47, %s48
    %p59 = scmp.eq.s32.totalorder %s13, 0
    %p60 = por %p58, %p59
    %p61 = scmp.ne.s32.totalorder %s47, %s48
    %p62 = scmp.eq.s32.totalorder %s14, 2
    %p63 = por %p61, %p62
    %p65 = scmp.ne.s32.totalorder %s48, %s64
    %p66 = scmp.eq.s32.totalorder %s14, 0
    %p67 = por %p65, %p66
    %s68 = ssub.s32 %s8, %s15
    %p69 = scmp.eq.s32.totalorder %s68, 0
    %s71 = sadd.s32 %s70, 1
    %s72 = scalar_select %p69, %s70, %s71
    %p75 = pneg %p69
    %p76 = scmp.eq.s32.totalorder %s8, 2
    %p77 = por %p75, %p76
    %p78 = scmp.ne.s32.totalorder %s70, %s73
    %p79 = scmp.eq.s32.totalorder %s8, 0
    %p80 = por %p78, %p79
    %p81 = scmp.ne.s32.totalorder %s70, %s73
    %p82 = scmp.eq.s32.totalorder %s13, 2
    %p83 = por %p81, %p82
    %p84 = scmp.ne.s32.totalorder %s73, %s74
    %p85 = scmp.eq.s32.totalorder %s13, 0
    %p86 = por %p84, %p85
    %p87 = scmp.ne.s32.totalorder %s73, %s74
    %p88 = scmp.eq.s32.totalorder %s14, 2
    %p89 = por %p87, %p88
    %p91 = scmp.ne.s32.totalorder %s74, %s90
    %p92 = scmp.eq.s32.totalorder %s14, 0
    %p93 = por %p91, %p92
    %p94 = scmp.le.s32.totalorder 1, %s8
    %p95 = scmp.lt.s32.totalorder %s8, 4
    %p96 = pnand %p94, %p95
    %p97 = pneg %p96
    // Predicated region
    $region9: #{tpu_custom_call.1} parent=5 // pred_check
      _
    $region10: #{tpu_custom_call.1} parent=5 // pred_check_branch
      %99 = sbr.rel (%p96) target = $region12
    $region11: #{tpu_custom_call.1} parent=5 // pred_region
      %s100 = ssub.s32 %s8, 1
    $region12: #{tpu_custom_call.1} parent=5 // pred_fallthru
      _
    %p101 = scmp.lt.s32.totalorder %s8, 3
    // Predicated region
    $region13: #{tpu_custom_call.1} parent=5 // pred_check
      %p102 = pneg %p101
    $region14: #{tpu_custom_call.1} parent=5 // pred_check_branch
      %104 = sbr.rel (%p102) target = $region16
    $region15: #{tpu_custom_call.1} parent=5 // pred_region
      // Predicated region
      $region17: #{tpu_custom_call.1} parent=15 // pred_check
        %p105 = pneg %p28
      $region18: #{tpu_custom_call.1} parent=15 // pred_check_branch
        %107 = sbr.rel (%p105) target = $region20
      $region19: #{tpu_custom_call.1} parent=15 // pred_region
        %p108 = scmp.lt.s32.totalorder %s8, 2
        %s109 = scalar_select %p108, %s8, 2
        %s110 = smul.addr %s109, 8
        %s111 = scalar_lea.vmem %s0, %s110
      $region20: #{tpu_custom_call.1} parent=15 // pred_fallthru
        _
      // Predicated region
      $region21: #{tpu_custom_call.1} parent=15 // pred_check
        %p112 = pneg %p54
      $region22: #{tpu_custom_call.1} parent=15 // pred_check_branch
        %114 = sbr.rel (%p112) target = $region24
      $region23: #{tpu_custom_call.1} parent=15 // pred_region
        %p115 = scmp.lt.s32.totalorder %s8, 2
        %s116 = scalar_select %p115, %s8, 2
        %s117 = smul.addr %s116, 8
        %s118 = scalar_lea.vmem %s1, %s117
      $region24: #{tpu_custom_call.1} parent=15 // pred_fallthru
        _
    $region16: #{tpu_custom_call.1} parent=5 // pred_fallthru
      _
    %p119 = scmp.le.s32.totalorder 1, %s8
    %p120 = scmp.lt.s32.totalorder %s8, 4
    %p121 = pnand %p119, %p120
    %p122 = pneg %p121
    // Predicated region
    $region25: #{tpu_custom_call.1} parent=5 // pred_check
      _
    $region26: #{tpu_custom_call.1} parent=5 // pred_check_branch
      %124 = sbr.rel (%p121) target = $region28
    $region27: #{tpu_custom_call.1} parent=5 // pred_region
      %s125 = ssub.s32 %s8, 1
      %p126 = scmp.lt.s32.totalorder %s13, 2
      %s127 = scalar_select %p126, %s13, 2
      %s128 = smul.addr %s127, 8
      %s129 = scalar_lea.vmem %s0, %s128
      %p130 = pneg %p34
      %p131 = pneg %p31
      %p132 = scmp.lt.s32.totalorder %s13, 2
      %s133 = scalar_select %p132, %s13, 2
      %s134 = smul.addr %s133, 8
      %s135 = scalar_lea.vmem %s1, %s134
      %p136 = pneg %p60
      %p137 = pneg %p57
      %p138 = pneg %p86
      %p139 = pneg %p83
      %p140 = scmp.lt.s32.totalorder %s13, 2
      %s141 = scalar_select %p140, %s13, 2
      %s142 = smul.addr %s141, 8
      %s143 = scalar_lea.vmem %s2, %s142
      %p144 = scmp.lt.s32.totalorder %s13, 2
      %s145 = scalar_select %p144, %s13, 2
      %s146 = smul.addr %s145, 8
      %s147 = scalar_lea.vmem %s0, %s146
      %p148 = scmp.lt.s32.totalorder %s13, 2
      %s149 = scalar_select %p148, %s13, 2
      %s150 = smul.addr %s149, 8
      %s151 = scalar_lea.vmem %s1, %s150
      %p152 = scmp.lt.s32.totalorder %s13, 2
      %s153 = scalar_select %p152, %s13, 2
      %s154 = smul.addr %s153, 8
      %s155 = scalar_lea.vmem %s2, %s154
      %v156 = vld [vmem:[%s147] sm:$0xff]
      %157 = vmax.xlane.f32.xlu0 %v156
      %v158 = vpop.xlane.xlu0 %157
      %v159 = vsub.f32 %v156, %v158
      %v160 = vmul.f32 %v159, 1.442695
      %v161 = vpow.pop %v160
      %162 = vadd.xlane.f32.xlu0 %v161
      %v163 = vpop.xlane.xlu0 %162
      %v164 = vlog2.pop %v163
      %v165 = vmul.f32 %v164, 0.6931472
      %v166 = vadd.f32 %v158, %v165
      %v167 = vld [vmem:[%s151] sm:$0xff]
      %v168 = vlaneseq
      %v169 = vand.u32 %v168, 127
      %170 = vset.pattern.permute.xlu0 0
      %171 = vperm.xlu0 %170, %v167
      %v172 = vpop.permute.xlu0 %171
      %vm173 = vcmp.eq.s32.totalorder %v169, %v172
      %174 = vadd.xlane.f32.xlu0 %v156
      %v175 = vpop.xlane.xlu0 %174
      %v176 = vsel %vm173, %v156, 0.0
      %177 = vadd.xlane.f32.xlu0 %v176
      %v178 = vpop.xlane.xlu0 %177
      %v179 = vmul.f32 %v166, 128.0
      %v180 = vsub.f32 %v175, %v179
      %v181 = vsub.f32 %v178, %v166
      %v182 = vsub.f32 %v180, %v181
      %v183 = vmul.f32 %v182, 0.0007874016
      %v184 = vmul.f32 %v181, 0.9
      %v185 = vadd.f32 %v183, %v184
      %v186 = vsub.f32 0.0, %v185
      %s187 = smul.u32 %s13, 8
      %v188 = vlaneseq
      %v189 = vshrl.u32 %v188, 7
      %v190 = vstv %s187
      %v191 = vadd.s32 %v190, %v189
      %vm192 = vcmp.lt.s32.totalorder %v191, 20
      %v193 = vsel %vm192, %v186, 0.0
      %vm194 = vcmask 7168
      %195 = vst.msk [vmem:[%s155] sm:$0xff] %vm194, %v193
      %p196 = scmp.lt.s32.totalorder %s13, 2
      %s197 = scalar_select %p196, %s13, 2
      %s198 = smul.addr %s197, 8
      %s199 = scalar_lea.vmem %s2, %s198
      // Predicated region
      $region29: #{tpu_custom_call.1} parent=27 // pred_check
        %p200 = pneg %p83
      $region30: #{tpu_custom_call.1} parent=27 // pred_check_branch
        %202 = sbr.rel (%p200) target = $region32
      $region31: #{tpu_custom_call.1} parent=27 // pred_region
        _
      $region32: #{tpu_custom_call.1} parent=27 // pred_fallthru
        _
    $region28: #{tpu_custom_call.1} parent=5 // pred_fallthru
      _
    %p203 = scmp.le.s32.totalorder 2, %s8
    // Predicated region
    $region33: #{tpu_custom_call.1} parent=5 // pred_check
      %p204 = pneg %p203
    $region34: #{tpu_custom_call.1} parent=5 // pred_check_branch
      %206 = sbr.rel (%p204) target = $region36
    $region35: #{tpu_custom_call.1} parent=5 // pred_region
      %s207 = ssub.s32 %s8, 2
      // Predicated region
      $region37: #{tpu_custom_call.1} parent=35 // pred_check
        %p208 = pneg %p89
      $region38: #{tpu_custom_call.1} parent=35 // pred_check_branch
        %210 = sbr.rel (%p208) target = $region40
      $region39: #{tpu_custom_call.1} parent=35 // pred_region
        %p211 = scmp.lt.s32.totalorder %s14, 2
        %s212 = scalar_select %p211, %s14, 2
        %s213 = smul.addr %s212, 8
        %s214 = scalar_lea.vmem %s2, %s213
      $region40: #{tpu_custom_call.1} parent=35 // pred_fallthru
        _
    $region36: #{tpu_custom_call.1} parent=5 // pred_fallthru
      _
  $region6: #{tpu_custom_call.1} parent=0 // loop_footer
    %s12 = sadd.s32 1, %s8
  $region7: #{tpu_custom_call.1} parent=0 // loop_footer_branch
    %7 = sbr.rel target = $region3
  $region8: #{tpu_custom_call.1} parent=0 // loop_exit
    _

</llo_original>
